<compile_context>
chip_gen: v6e
topology: v6e:2x2x1
jax: 0.10.0
libtpu: 0.0.40
codegen_flags: <defaults>
</compile_context>

<pallas_src>
import jax
import jax.numpy as jnp
from jax import lax
from jax.experimental import pallas as pl
from jax.experimental.pallas import tpu as pltpu


def gcn_kernel(a_ref, xk_ref, xi_ref, drow_ref, wt_ref, b_ref, o_ref, acc_ref):
    k = pl.program_id(1)

    @pl.when(k == 0)
    def _():
        # Seed the accumulator with the self-loop (identity) contribution so
        # acc ends up holding (A + I) @ Xd for this row tile.
        acc_ref[...] = xi_ref[...].astype(jnp.float32)

    # Aggregation: A @ Xd for this (row, K) tile.  bf16 MXU, f32 accumulation.
    acc_ref[...] += jnp.dot(a_ref[...], xk_ref[...],
                            preferred_element_type=jnp.float32)

    @pl.when(k == pl.num_programs(1) - 1)
    def _():
        # Row normalization in place: h stays in the VMEM scratch, and the
        # second (small) matmul streams straight out of it.
        acc_ref[...] *= drow_ref[...]
        out = jnp.dot(acc_ref[...], wt_ref[...],
                      preferred_element_type=jnp.float32)
        o_ref[...] = jnp.maximum(out + b_ref[...], 0.0)


def _round_up(x, m):
    return ((x + m - 1) // m) * m


def _largest_tile(desired, total):
    """Largest multiple of 128 that is <= desired and divides `total`."""
    t = max(128, (min(desired, total) // 128) * 128)
    while total % t:
        t -= 128
    return t


def gcn_forward(X, A, W, b, *, tm=512, tk=2048, d=None):
    """X: (N, C_in), A: (N, N) adjacency (f32 or bf16), W: (C_out, C_in),
    b: (C_out,).  Returns (N, C_out) f32.  Optionally pass a precomputed
    d = rsqrt(deg) of shape (N,) or (N, 1) for multi-layer / repeated-graph use.
    """
    N, c_in = X.shape
    c_out = W.shape[0]

    # ---- sizes --------------------------------------------------------------
    n_pad = _round_up(N, 128)
    c_in_p = _round_up(c_in, 128)
    c_out_p = _round_up(c_out, 128)

    tm = _largest_tile(tm, n_pad)
    tk = _largest_tile(tk, n_pad)
    # Keep >= 2 row tiles when possible so the "parallel" axis can be sharded
    # across both TensorCores on megacore parts (v7x).
    if n_pad // tm < 2 and n_pad > 128:
        tm = _largest_tile(n_pad // 2, n_pad)

    # ---- host-side prep (one pass over f32 A, O(N*C) elsewhere) -------------
    A_bf = A if A.dtype == jnp.bfloat16 else A.astype(jnp.bfloat16)  # 0/1 exact
    if d is None:
        deg = jnp.sum(A_bf, axis=1, keepdims=True, dtype=jnp.float32) + 1.0
        d = lax.rsqrt(deg)                                            # (N, 1)
    d = d.astype(jnp.float32).reshape(N, 1)

    Xd = (d * X.astype(jnp.float32)).astype(jnp.bfloat16)             # (N, C_in)

    A_p = jnp.pad(A_bf, ((0, n_pad - N), (0, n_pad - N)))
    Xd_p = jnp.pad(Xd, ((0, n_pad - N), (0, c_in_p - c_in)))
    d_p = jnp.pad(d, ((0, n_pad - N), (0, 0)), constant_values=1.0)
    Wt = jnp.pad(W.T.astype(jnp.float32),
                 ((0, c_in_p - c_in), (0, c_out_p - c_out)))          # (Cin_p, Cout_p)
    bp = jnp.pad(b.astype(jnp.float32), (0, c_out_p - c_out)).reshape(1, c_out_p)

    grid = (n_pad // tm, n_pad // tk)      # reduction (K) axis last

    # Explicit VMEM budget for the double-buffered pipeline, with headroom.
    budget = (2 * tm * tk * 2 +            # A tile           (bf16, x2 buffers)
              2 * tk * c_in_p * 2 +        # Xd (K) tile      (bf16)
              2 * tm * c_in_p * 2 +        # Xd (row) tile    (bf16)
              2 * tm * 4 +                 # d row tile
              2 * c_in_p * c_out_p * 4 +   # W^T (resident)
              2 * c_out_p * 4 +            # bias
              2 * tm * c_out_p * 4 +       # output tile
              tm * c_in_p * 4)             # f32 accumulator scratch
    vmem_limit = min(64 << 20, max(32 << 20, int(1.5 * budget)))

    out = pl.pallas_call(
        gcn_kernel,
        out_shape=jax.ShapeDtypeStruct((n_pad, c_out_p), jnp.float32),
        grid_spec=pltpu.PrefetchScalarGridSpec(
            num_scalar_prefetch=0,
            grid=grid,
            in_specs=[
                pl.BlockSpec((tm, tk), lambda i, k: (i, k)),           # A tile
                pl.BlockSpec((tk, c_in_p), lambda i, k: (k, 0)),       # Xd (contraction)
                pl.BlockSpec((tm, c_in_p), lambda i, k: (i, 0)),       # Xd rows (self loop)
                pl.BlockSpec((tm, 1), lambda i, k: (i, 0)),            # d (row scale)
                pl.BlockSpec((c_in_p, c_out_p), lambda i, k: (0, 0)),  # W^T (resident)
                pl.BlockSpec((1, c_out_p), lambda i, k: (0, 0)),       # bias (resident)
            ],
            out_specs=pl.BlockSpec((tm, c_out_p), lambda i, k: (i, 0)),
            scratch_shapes=[pltpu.VMEM((tm, c_in_p), jnp.float32)],
        ),
        compiler_params=pltpu.CompilerParams(
            dimension_semantics=("parallel", "arbitrary"),
            vmem_limit_bytes=vmem_limit),
    )(A_p, Xd_p, Xd_p, d_p, Wt, bp)

    return out[:N, :c_out]


if __name__ == "__main__":
    N = 256        # number of graph nodes
    C_IN = 16      # in_channels
    C_OUT = 32     # out_channels

    key = jax.random.PRNGKey(0)
    k_x, k_a, k_w, k_b = jax.random.split(key, 4)

    # Node features
    X = jax.random.normal(k_x, (N, C_IN), dtype=jnp.float32)

    # Symmetric binary adjacency, no self loops (the kernel folds A + I in).
    A_rand = jax.random.uniform(k_a, (N, N)) < 0.05
    A = jnp.triu(A_rand.astype(jnp.float32), k=1)
    A = A + A.T

    # nn.Linear default init: U(-1/sqrt(in), 1/sqrt(in))
    bound = 1.0 / (C_IN ** 0.5)
    W = jax.random.uniform(k_w, (C_OUT, C_IN), minval=-bound, maxval=bound,
                           dtype=jnp.float32)
    b = jax.random.uniform(k_b, (C_OUT,), minval=-bound, maxval=bound,
                           dtype=jnp.float32)

    out = gcn_forward(X, A, W, b)
    jax.block_until_ready(out)

    # Pure-JAX reference (same semantics as the PyTorch module).
    A_hat = A + jnp.eye(N, dtype=jnp.float32)
    deg = jnp.sum(A_hat, axis=1)
    D = jnp.diag(1.0 / jnp.sqrt(deg))
    ref = jnp.maximum(D @ A_hat @ D @ X @ W.T + b, 0.0)

    # bf16 MXU operands (A, d*X) with f32 accumulation: loosened tolerance.
    max_err = jnp.max(jnp.abs(out - ref))
    assert jnp.allclose(out, ref, atol=2e-2, rtol=2e-2), (
        f"mismatch vs reference, max abs err = {max_err}")

    print("KERNEL_OK")
</pallas_src>

<mosaic_0001>
module attributes {stable_mosaic.version = 11 : i64} {
  func.func @gcn_kernel(%arg0: i32, %arg1: i32, %arg2: memref<128x256xbf16, #tpu.memory_space<vmem>>, %arg3: memref<256x128xbf16, #tpu.memory_space<vmem>>, %arg4: memref<128x128xbf16, #tpu.memory_space<vmem>>, %arg5: memref<128x1xf32, #tpu.memory_space<vmem>>, %arg6: memref<128x128xf32, #tpu.memory_space<vmem>>, %arg7: memref<1x128xf32, #tpu.memory_space<vmem>>, %arg8: memref<128x128xf32, #tpu.memory_space<vmem>>, %arg9: memref<128x128xf32, #tpu.memory_space<vmem>>) attributes {dimension_semantics = [#tpu.dimension_semantics<parallel>, #tpu.dimension_semantics<arbitrary>], iteration_bounds = array<i64: 2, 1>, scalar_prefetch = 0 : i64, scratch_operands = 1 : i64, tpu.core_type = #tpu.core_type<tc>, window_params = [{transform_indices = @transform_0, window_bounds = array<i64: 128, 256>}, {transform_indices = @transform_1, window_bounds = array<i64: 256, 128>}, {transform_indices = @transform_2, window_bounds = array<i64: 128, 128>}, {transform_indices = @transform_3, window_bounds = array<i64: 128, 1>}, {pipeline_mode = #tpu.pipeline_mode<synchronous>, transform_indices = @transform_4, window_bounds = array<i64: 128, 128>}, {pipeline_mode = #tpu.pipeline_mode<synchronous>, transform_indices = @transform_5, window_bounds = array<i64: 1, 128>}, {transform_indices = @transform_6, window_bounds = array<i64: 128, 128>}]} {
    %c0_i32 = arith.constant 0 : i32
    %0 = arith.cmpi eq, %arg1, %c0_i32 : i32
    %1 = arith.extui %0 : i1 to i32
    %c0_i32_0 = arith.constant 0 : i32
    %2 = arith.cmpi ne, %1, %c0_i32_0 : i32
    scf.if %2 {
      %c0_10 = arith.constant 0 : index
      %c0_11 = arith.constant 0 : index
      %12 = vector.load %arg4[%c0_10, %c0_11] : memref<128x128xbf16, #tpu.memory_space<vmem>>, vector<128x128xbf16>
      %13 = arith.extf %12 : vector<128x128xbf16> to vector<128x128xf32>
      %c0_12 = arith.constant 0 : index
      %c0_13 = arith.constant 0 : index
      %14 = vector.load %arg9[%c0_12, %c0_13] : memref<128x128xf32, #tpu.memory_space<vmem>>, vector<128x128xf32>
      tpu.vector_store %arg9[%c0_12, %c0_13], %13 {strides = array<i32>} : memref<128x128xf32, #tpu.memory_space<vmem>>, vector<128x128xf32>,
    } else {
    }
    %c0 = arith.constant 0 : index
    %c0_1 = arith.constant 0 : index
    %3 = vector.load %arg9[%c0, %c0_1] : memref<128x128xf32, #tpu.memory_space<vmem>>, vector<128x128xf32>
    %c0_2 = arith.constant 0 : index
    %c0_3 = arith.constant 0 : index
    %4 = vector.load %arg2[%c0_2, %c0_3] : memref<128x256xbf16, #tpu.memory_space<vmem>>, vector<128x256xbf16>
    %c0_4 = arith.constant 0 : index
    %c0_5 = arith.constant 0 : index
    %5 = vector.load %arg3[%c0_4, %c0_5] : memref<256x128xbf16, #tpu.memory_space<vmem>>, vector<256x128xbf16>
    %cst = arith.constant dense<0.000000e+00> : vector<128x128xf32>
    %6 = tpu.matmul %4, %5, %cst {dimension_numbers = #tpu.dot_dimension_numbers<[1], [0], [0], [1], [0, 0, 1, 1], [], []>} : vector<128x256xbf16>, vector<256x128xbf16>, vector<128x128xf32> -> vector<128x128xf32>
    %7 = arith.addf %3, %6 : vector<128x128xf32>
    %c0_6 = arith.constant 0 : index
    %c0_7 = arith.constant 0 : index
    %8 = vector.load %arg9[%c0_6, %c0_7] : memref<128x128xf32, #tpu.memory_space<vmem>>, vector<128x128xf32>
    tpu.vector_store %arg9[%c0_6, %c0_7], %7 {strides = array<i32>} : memref<128x128xf32, #tpu.memory_space<vmem>>, vector<128x128xf32>,
    %c0_i32_8 = arith.constant 0 : i32
    %9 = arith.cmpi eq, %arg1, %c0_i32_8 : i32
    %10 = arith.extui %9 : i1 to i32
    %c0_i32_9 = arith.constant 0 : i32
    %11 = arith.cmpi ne, %10, %c0_i32_9 : i32
    scf.if %11 {
      %c0_10 = arith.constant 0 : index
      %c0_11 = arith.constant 0 : index
      %12 = vector.load %arg9[%c0_10, %c0_11] : memref<128x128xf32, #tpu.memory_space<vmem>>, vector<128x128xf32>
      %c0_12 = arith.constant 0 : index
      %c0_13 = arith.constant 0 : index
      %13 = vector.load %arg5[%c0_12, %c0_13] : memref<128x1xf32, #tpu.memory_space<vmem>>, vector<128x1xf32>
      %14 = vector.broadcast %13 : vector<128x1xf32> to vector<128x128xf32>
      %15 = arith.mulf %12, %14 : vector<128x128xf32>
      %c0_14 = arith.constant 0 : index
      %c0_15 = arith.constant 0 : index
      %16 = vector.load %arg9[%c0_14, %c0_15] : memref<128x128xf32, #tpu.memory_space<vmem>>, vector<128x128xf32>
      tpu.vector_store %arg9[%c0_14, %c0_15], %15 {strides = array<i32>} : memref<128x128xf32, #tpu.memory_space<vmem>>, vector<128x128xf32>,
      %c0_16 = arith.constant 0 : index
      %c0_17 = arith.constant 0 : index
      %17 = vector.load %arg9[%c0_16, %c0_17] : memref<128x128xf32, #tpu.memory_space<vmem>>, vector<128x128xf32>
      %c0_18 = arith.constant 0 : index
      %c0_19 = arith.constant 0 : index
      %18 = vector.load %arg6[%c0_18, %c0_19] : memref<128x128xf32, #tpu.memory_space<vmem>>, vector<128x128xf32>
      %cst_20 = arith.constant dense<0.000000e+00> : vector<128x128xf32>
      %19 = tpu.matmul %17, %18, %cst_20 {dimension_numbers = #tpu.dot_dimension_numbers<[1], [0], [0], [1], [0, 0, 1, 1], [], []>} : vector<128x128xf32>, vector<128x128xf32>, vector<128x128xf32> -> vector<128x128xf32>
      %c0_21 = arith.constant 0 : index
      %c0_22 = arith.constant 0 : index
      %20 = vector.load %arg7[%c0_21, %c0_22] : memref<1x128xf32, #tpu.memory_space<vmem>>, vector<1x128xf32>
      %21 = vector.broadcast %20 : vector<1x128xf32> to vector<128x128xf32>
      %22 = arith.addf %19, %21 : vector<128x128xf32>
      %cst_23 = arith.constant 0.000000e+00 : f32
      %23 = vector.broadcast %cst_23 : f32 to vector<128x128xf32>
      %24 = arith.maximumf %22, %23 : vector<128x128xf32>
      %c0_24 = arith.constant 0 : index
      %c0_25 = arith.constant 0 : index
      %25 = vector.load %arg8[%c0_24, %c0_25] : memref<128x128xf32, #tpu.memory_space<vmem>>, vector<128x128xf32>
      tpu.vector_store %arg8[%c0_24, %c0_25], %24 {strides = array<i32>} : memref<128x128xf32, #tpu.memory_space<vmem>>, vector<128x128xf32>,
    } else {
    }
    return
  }
  func.func @transform_0(%arg0: i32, %arg1: i32) -> (i32, i32) {
    %c0_i32 = arith.constant 0 : i32
    return %arg0, %arg1 : i32, i32
  }
  func.func @transform_1(%arg0: i32, %arg1: i32) -> (i32, i32) {
    %c0_i32 = arith.constant 0 : i32
    %c0_i32_0 = arith.constant 0 : i32
    return %arg1, %c0_i32 : i32, i32
  }
  func.func @transform_2(%arg0: i32, %arg1: i32) -> (i32, i32) {
    %c0_i32 = arith.constant 0 : i32
    %c0_i32_0 = arith.constant 0 : i32
    return %arg0, %c0_i32 : i32, i32
  }
  func.func @transform_3(%arg0: i32, %arg1: i32) -> (i32, i32) {
    %c0_i32 = arith.constant 0 : i32
    %c0_i32_0 = arith.constant 0 : i32
    return %arg0, %c0_i32 : i32, i32
  }
  func.func @transform_4(%arg0: i32, %arg1: i32) -> (i32, i32) {
    %c0_i32 = arith.constant 0 : i32
    %c0_i32_0 = arith.constant 0 : i32
    %c0_i32_1 = arith.constant 0 : i32
    return %c0_i32, %c0_i32_0 : i32, i32
  }
  func.func @transform_5(%arg0: i32, %arg1: i32) -> (i32, i32) {
    %c0_i32 = arith.constant 0 : i32
    %c0_i32_0 = arith.constant 0 : i32
    %c0_i32_1 = arith.constant 0 : i32
    return %c0_i32, %c0_i32_0 : i32, i32
  }
  func.func @transform_6(%arg0: i32, %arg1: i32) -> (i32, i32) {
    %c0_i32 = arith.constant 0 : i32
    %c0_i32_0 = arith.constant 0 : i32
    return %arg0, %c0_i32 : i32, i32
  }
}

</mosaic_0001>

<llo_original>
// kernel: tpu_custom_call.1
$region0: #{tpu_custom_call.1}
  #allocation0 [shape = 'u32[]', space=smem, size = 0x4, offset = 0x4, fixed_abs, tag = 'smem constant byte address 0x4 - core index']
  #allocation1 [shape = 'u32[144,128]{1,0:T(1,128)}', space=vmem, size = 0x12000, scoped, tag = 'internal scratch']
  #allocation2 [shape = 'f32[128,128]{1,0:T(8,128)}', space=vmem, size = 0x10000, scoped, tag = 'scratch operand']
  %s0 = inlined_call_operand.vmem [shape: bf16[256,256], index: 0, kind: input, shape index: {}]
  %s1 = inlined_call_operand.hbm [shape: bf16[256,128], index: 1, kind: input, shape index: {}]
  %s2 = inlined_call_operand.hbm [shape: bf16[256,128], index: 2, kind: input, shape index: {}]
  %s3 = inlined_call_operand.vmem [shape: f32[256,1], index: 3, kind: input, shape index: {}]
  %s4 = inlined_call_operand.hbm [shape: f32[128,128], index: 4, kind: input, shape index: {}]
  %s5 = inlined_call_operand.vmem [shape: f32[1,128], index: 5, kind: input, shape index: {}]
  %s6 = inlined_call_operand.hbm [shape: f32[256,128], index: 6, kind: output, shape index: {}]
  %s7 = sld [smem:[#allocation0]]
  $region77: #{tpu_custom_call.1} parent=0
    _
  %s9 = ssub.s32 1, %s7
  %s10 = scalar_select 0, %s9, %s7
  $region1: #{tpu_custom_call.1} parent=0
    #allocation3 [shape = 'u8[65536]{0}', space=vmem, size = 0x10000, scoped, tag = 'input window, operand 1, single buffered']
    #allocation4 [shape = 's32[2]{0}', space=sflag, size = 0x8, scoped, tag = 'scoped memory for tpu_custom_call.1']
    #allocation5 [shape = 's32[2]{0}', space=sflag, size = 0x8, scoped, tag = 'scoped memory for tpu_custom_call.1']
    #allocation6 [shape = 'u8[65536]{0}', space=vmem, size = 0x10000, scoped, tag = 'input window, operand 2']
    #allocation7 [shape = 's32[2]{0}', space=sflag, size = 0x8, scoped, tag = 'scoped memory for tpu_custom_call.1']
    #allocation8 [shape = 'u8[65536]{0}', space=vmem, size = 0x10000, scoped, tag = 'input window, operand 4, single buffered']
    #allocation9 [shape = 'u8[131072]{0}', space=vmem, size = 0x20000, scoped, tag = 'output window, operand 0']
    %11 = vsyncpa [#allocation4], 0
    %12 = vsyncpa [#allocation7], 0
    %s13 = scalar_lea.sflag [#allocation7], 1
    %14 = vsyncpa %s13, 0
    %15 = vsyncpa [#allocation5], 0
    %s16 = scalar_lea.sflag [#allocation5], 1
    %17 = vsyncpa %s16, 0
    loop: start=0, step=1, limit=4
    $region2: #{tpu_custom_call.1} parent=1 // loop_pre_header
      _
    $region3: #{tpu_custom_call.1} parent=1 // loop_header
      %s19 = sphi 0, %s23
      %p20 = scmp.ge.s32.totalorder %s19, 4
      %s26 = sphi 0, %s38
      %s27 = sphi 0, %s34
      %s28 = sphi 0, %s26
      %s29 = sphi 0, %s27
      %s30 = sphi 0, %s28
      %s31 = sphi 0, %s29
      %s43 = sphi 0, %s45
      %s46 = sphi 0, %s43
      %s47 = sphi 0, %s46
      %s63 = sphi 0, %s47
      %s69 = sphi 0, %s71
      %s72 = sphi 0, %s69
      %s73 = sphi 0, %s72
      %s89 = sphi 0, %s73
      %s95 = sphi 0, %s97
      %s98 = sphi 0, %s95
      %s99 = sphi 0, %s98
      %s115 = sphi 0, %s99
      %s121 = sphi 0, %s123
      %s124 = sphi 0, %s121
      %s125 = sphi 0, %s124
      %s141 = sphi 0, %s125
      %s145 = sphi 0, %s145
      %s147 = sphi 0, %s145
      %s148 = sphi 0, %s147
      %s162 = sphi 0, %s148
      %s166 = sphi 0, %s166
      %s168 = sphi 0, %s166
      %s169 = sphi 0, %s168
      %s183 = sphi 0, %s169
      %s189 = sphi 0, %s191
      %s192 = sphi 0, %s189
      %s193 = sphi 0, %s192
      %s209 = sphi 0, %s193
    $region4: #{tpu_custom_call.1} parent=1 // loop_header_branch
      %22 = sbr.rel (%p20) target = $region8
    $region5: #{tpu_custom_call.1} parent=1 // loop_body
      %s24 = ssub.s32 %s19, 1
      %s25 = ssub.s32 %s19, 2
      %s32 = sadd.s32 1, %s27
      %p33 = scmp.ge.s32.totalorder %s32, 1
      %s34 = scalar_select %p33, 0, %s32
      %s35 = sadd.s32 1, %s26
      %s36 = scalar_select %p33, %s35, %s26
      %p37 = scmp.ge.s32.totalorder %s36, 2
      %s38 = scalar_select %p37, 0, %s36
      %s39 = ssub.s32 %s26, %s38
      %s40 = ssub.s32 %s27, %s34
      %s41 = sor.u32 %s39, %s40
      %p42 = scmp.eq.s32.totalorder %s41, 0
      %s44 = sadd.s32 %s43, 1
      %s45 = scalar_select %p42, %s43, %s44
      %p48 = pneg %p42
      %p49 = scmp.eq.s32.totalorder %s19, 1
      %p50 = por %p48, %p49
      %p51 = scmp.ne.s32.totalorder %s43, %s46
      %p52 = scmp.eq.s32.totalorder %s19, 0
      %p53 = por %p51, %p52
      %p54 = scmp.ne.s32.totalorder %s43, %s46
      %p55 = scmp.eq.s32.totalorder %s24, 1
      %p56 = por %p54, %p55
      %p57 = scmp.ne.s32.totalorder %s46, %s47
      %p58 = scmp.eq.s32.totalorder %s24, 0
      %p59 = por %p57, %p58
      %p60 = scmp.ne.s32.totalorder %s46, %s47
      %p61 = scmp.eq.s32.totalorder %s25, 1
      %p62 = por %p60, %p61
      %p64 = scmp.ne.s32.totalorder %s47, %s63
      %p65 = scmp.eq.s32.totalorder %s25, 0
      %p66 = por %p64, %p65
      %s67 = ssub.s32 %s27, %s34
      %p68 = scmp.eq.s32.totalorder %s67, 0
      %s70 = sadd.s32 %s69, 1
      %s71 = scalar_select %p68, %s69, %s70
      %p74 = pneg %p68
      %p75 = scmp.eq.s32.totalorder %s19, 1
      %p76 = por %p74, %p75
      %p77 = scmp.ne.s32.totalorder %s69, %s72
      %p78 = scmp.eq.s32.totalorder %s19, 0
      %p79 = por %p77, %p78
      %p80 = scmp.ne.s32.totalorder %s69, %s72
      %p81 = scmp.eq.s32.totalorder %s24, 1
      %p82 = por %p80, %p81
      %p83 = scmp.ne.s32.totalorder %s72, %s73
      %p84 = scmp.eq.s32.totalorder %s24, 0
      %p85 = por %p83, %p84
      %p86 = scmp.ne.s32.totalorder %s72, %s73
      %p87 = scmp.eq.s32.totalorder %s25, 1
      %p88 = por %p86, %p87
      %p90 = scmp.ne.s32.totalorder %s73, %s89
      %p91 = scmp.eq.s32.totalorder %s25, 0
      %p92 = por %p90, %p91
      %s93 = ssub.s32 %s26, %s38
      %p94 = scmp.eq.s32.totalorder %s93, 0
      %s96 = sadd.s32 %s95, 1
      %s97 = scalar_select %p94, %s95, %s96
      %p100 = pneg %p94
      %p101 = scmp.eq.s32.totalorder %s19, 1
      %p102 = por %p100, %p101
      %p103 = scmp.ne.s32.totalorder %s95, %s98
      %p104 = scmp.eq.s32.totalorder %s19, 0
      %p105 = por %p103, %p104
      %p106 = scmp.ne.s32.totalorder %s95, %s98
      %p107 = scmp.eq.s32.totalorder %s24, 1
      %p108 = por %p106, %p107
      %p109 = scmp.ne.s32.totalorder %s98, %s99
      %p110 = scmp.eq.s32.totalorder %s24, 0
      %p111 = por %p109, %p110
      %p112 = scmp.ne.s32.totalorder %s98, %s99
      %p113 = scmp.eq.s32.totalorder %s25, 1
      %p114 = por %p112, %p113
      %p116 = scmp.ne.s32.totalorder %s99, %s115
      %p117 = scmp.eq.s32.totalorder %s25, 0
      %p118 = por %p116, %p117
      %s119 = ssub.s32 %s26, %s38
      %p120 = scmp.eq.s32.totalorder %s119, 0
      %s122 = sadd.s32 %s121, 1
      %s123 = scalar_select %p120, %s121, %s122
      %p126 = pneg %p120
      %p127 = scmp.eq.s32.totalorder %s19, 1
      %p128 = por %p126, %p127
      %p129 = scmp.ne.s32.totalorder %s121, %s124
      %p130 = scmp.eq.s32.totalorder %s19, 0
      %p131 = por %p129, %p130
      %p132 = scmp.ne.s32.totalorder %s121, %s124
      %p133 = scmp.eq.s32.totalorder %s24, 1
      %p134 = por %p132, %p133
      %p135 = scmp.ne.s32.totalorder %s124, %s125
      %p136 = scmp.eq.s32.totalorder %s24, 0
      %p137 = por %p135, %p136
      %p138 = scmp.ne.s32.totalorder %s124, %s125
      %p139 = scmp.eq.s32.totalorder %s25, 1
      %p140 = por %p138, %p139
      %p142 = scmp.ne.s32.totalorder %s125, %s141
      %p143 = scmp.eq.s32.totalorder %s25, 0
      %p144 = por %p142, %p143
      %s146 = sadd.s32 %s145, 1
      %p149 = scmp.eq.s32.totalorder %s19, 1
      %p150 = scmp.ne.s32.totalorder %s145, %s147
      %p151 = scmp.eq.s32.totalorder %s19, 0
      %p152 = por %p150, %p151
      %p153 = scmp.ne.s32.totalorder %s145, %s147
      %p154 = scmp.eq.s32.totalorder %s24, 1
      %p155 = por %p153, %p154
      %p156 = scmp.ne.s32.totalorder %s147, %s148
      %p157 = scmp.eq.s32.totalorder %s24, 0
      %p158 = por %p156, %p157
      %p159 = scmp.ne.s32.totalorder %s147, %s148
      %p160 = scmp.eq.s32.totalorder %s25, 1
      %p161 = por %p159, %p160
      %p163 = scmp.ne.s32.totalorder %s148, %s162
      %p164 = scmp.eq.s32.totalorder %s25, 0
      %p165 = por %p163, %p164
      %s167 = sadd.s32 %s166, 1
      %p170 = scmp.eq.s32.totalorder %s19, 1
      %p171 = scmp.ne.s32.totalorder %s166, %s168
      %p172 = scmp.eq.s32.totalorder %s19, 0
      %p173 = por %p171, %p172
      %p174 = scmp.ne.s32.totalorder %s166, %s168
      %p175 = scmp.eq.s32.totalorder %s24, 1
      %p176 = por %p174, %p175
      %p177 = scmp.ne.s32.totalorder %s168, %s169
      %p178 = scmp.eq.s32.totalorder %s24, 0
      %p179 = por %p177, %p178
      %p180 = scmp.ne.s32.totalorder %s168, %s169
      %p181 = scmp.eq.s32.totalorder %s25, 1
      %p182 = por %p180, %p181
      %p184 = scmp.ne.s32.totalorder %s169, %s183
      %p185 = scmp.eq.s32.totalorder %s25, 0
      %p186 = por %p184, %p185
      %s187 = ssub.s32 %s26, %s38
      %p188 = scmp.eq.s32.totalorder %s187, 0
      %s190 = sadd.s32 %s189, 1
      %s191 = scalar_select %p188, %s189, %s190
      %p194 = pneg %p188
      %p195 = scmp.eq.s32.totalorder %s19, 1
      %p196 = por %p194, %p195
      %p197 = scmp.ne.s32.totalorder %s189, %s192
      %p198 = scmp.eq.s32.totalorder %s19, 0
      %p199 = por %p197, %p198
      %p200 = scmp.ne.s32.totalorder %s189, %s192
      %p201 = scmp.eq.s32.totalorder %s24, 1
      %p202 = por %p200, %p201
      %p203 = scmp.ne.s32.totalorder %s192, %s193
      %p204 = scmp.eq.s32.totalorder %s24, 0
      %p205 = por %p203, %p204
      %p206 = scmp.ne.s32.totalorder %s192, %s193
      %p207 = scmp.eq.s32.totalorder %s25, 1
      %p208 = por %p206, %p207
      %p210 = scmp.ne.s32.totalorder %s193, %s209
      %p211 = scmp.eq.s32.totalorder %s25, 0
      %p212 = por %p210, %p211
      %p213 = scmp.le.s32.totalorder 1, %s19
      %p214 = scmp.lt.s32.totalorder %s19, 3
      %p215 = pnand %p213, %p214
      %p216 = pneg %p215
      // Predicated region
      $region9: #{tpu_custom_call.1} parent=5 // pred_check
        _
      $region10: #{tpu_custom_call.1} parent=5 // pred_check_branch
        %218 = sbr.rel (%p215) target = $region12
      $region11: #{tpu_custom_call.1} parent=5 // pred_region
        %s219 = ssub.s32 %s19, 1
        // Predicated region
        $region13: #{tpu_custom_call.1} parent=11 // pred_check
          %p220 = pneg %p85
        $region14: #{tpu_custom_call.1} parent=11 // pred_check_branch
          %222 = sbr.rel (%p220) target = $region16
        $region15: #{tpu_custom_call.1} parent=11 // pred_region
          %s223 = smul.u32 32, %s29
          %s225 = ssub.s32 2048, 2048
          %226 = vsyncadd [#allocation4], %s225
          %s227 = smul.addr %s223, 64
          %s228 = scalar_lea.hbm %s1, %s227
          %s229 = sshll.u32 [#allocation3], 4
          %s230 = int_to_ptr.vmem [resolvable:$true] %s229
          %235 = dma.hbm_to_vmem [thread:$0]  %s228, 2048, %s230, [#allocation4], 64, 64, 4
        $region16: #{tpu_custom_call.1} parent=11 // pred_fallthru
          _
        // Predicated region
        $region17: #{tpu_custom_call.1} parent=11 // pred_check
          %p236 = pneg %p158
        $region18: #{tpu_custom_call.1} parent=11 // pred_check_branch
          %238 = sbr.rel (%p236) target = $region20
        $region19: #{tpu_custom_call.1} parent=11 // pred_region
          %s240 = ssub.s32 2048, 2048
          %241 = vsyncadd [#allocation7], %s240
          %s242 = sshll.u32 [#allocation8], 4
          %s243 = int_to_ptr.vmem [resolvable:$true] %s242
          %248 = dma.hbm_to_vmem [thread:$0]  %s4, 2048, %s243, [#allocation7], 128, 128, 8
        $region20: #{tpu_custom_call.1} parent=11 // pred_fallthru
          _
        // Predicated region
        $region21: #{tpu_custom_call.1} parent=11 // pred_check
          %p249 = pneg %p179
        $region22: #{tpu_custom_call.1} parent=11 // pred_check_branch
          %251 = sbr.rel (%p249) target = $region24
        $region23: #{tpu_custom_call.1} parent=11 // pred_region
          _
        $region24: #{tpu_custom_call.1} parent=11 // pred_fallthru
          _
      $region12: #{tpu_custom_call.1} parent=5 // pred_fallthru
        _
      %p252 = scmp.lt.s32.totalorder %s19, 2
      // Predicated region
      $region25: #{tpu_custom_call.1} parent=5 // pred_check
        %p253 = pneg %p252
      $region26: #{tpu_custom_call.1} parent=5 // pred_check_branch
        %255 = sbr.rel (%p253) target = $region28
      $region27: #{tpu_custom_call.1} parent=5 // pred_region
        // Predicated region
        $region29: #{tpu_custom_call.1} parent=27 // pred_check
          %p256 = pneg %p53
        $region30: #{tpu_custom_call.1} parent=27 // pred_check_branch
          %258 = sbr.rel (%p256) target = $region32
        $region31: #{tpu_custom_call.1} parent=27 // pred_region
          %s259 = smul.u32 16, %s26
          %s260 = smul.u32 2, %s27
          %p261 = scmp.lt.s32.totalorder %s259, 31
          %s262 = scalar_select %p261, %s259, 31
          %p263 = scmp.lt.s32.totalorder %s260, 1
          %s264 = scalar_select %p263, %s260, 1
          %s265 = smul.addr %s262, 2
          %s266 = sadd.s32 %s264, %s265
          %s267 = smul.addr %s266, 4
          %s268 = scalar_lea.vmem %s0, %s267
          %s269 = smul.u32 16, %s26
          %s270 = smul.u32 2, %s27
        $region32: #{tpu_custom_call.1} parent=27 // pred_fallthru
          _
        // Predicated region
        $region33: #{tpu_custom_call.1} parent=27 // pred_check
          %p271 = pneg %p105
        $region34: #{tpu_custom_call.1} parent=27 // pred_check_branch
          %273 = sbr.rel (%p271) target = $region36
        $region35: #{tpu_custom_call.1} parent=27 // pred_region
          %s274 = sand.u32 %s19, 1
          %s275 = scalar_lea.sflag [#allocation7], %s274
          %s276 = sand.u32 %s95, 1
          %s277 = smul.addr %s276, 64
          %s278 = scalar_lea.vmem [#allocation6], %s277
          %s279 = smul.u32 16, %s26
          %s281 = ssub.s32 1024, 1024
          %282 = vsyncadd %s275, %s281
          %s283 = smul.addr %s279, 64
          %s284 = scalar_lea.hbm %s2, %s283
          %s285 = sshll.u32 %s278, 4
          %s286 = int_to_ptr.vmem [resolvable:$true] %s285
          %291 = dma.hbm_to_vmem [thread:$0]  %s284, 1024, %s286, %s275, 64, 64, 4
        $region36: #{tpu_custom_call.1} parent=27 // pred_fallthru
          _
        // Predicated region
        $region37: #{tpu_custom_call.1} parent=27 // pred_check
          %p292 = pneg %p131
        $region38: #{tpu_custom_call.1} parent=27 // pred_check_branch
          %294 = sbr.rel (%p292) target = $region40
        $region39: #{tpu_custom_call.1} parent=27 // pred_region
          %s295 = smul.u32 16, %s26
          %p296 = scmp.lt.s32.totalorder %s295, 31
          %s297 = scalar_select %p296, %s295, 31
          %s298 = smul.addr %s297, 8
          %s299 = scalar_lea.vmem %s3, %s298
          %s300 = smul.u32 16, %s26
        $region40: #{tpu_custom_call.1} parent=27 // pred_fallthru
          _
      $region28: #{tpu_custom_call.1} parent=5 // pred_fallthru
        _
      %p301 = scmp.le.s32.totalorder 1, %s19
      %p302 = scmp.lt.s32.totalorder %s19, 3
      %p303 = pnand %p301, %p302
      %p304 = pneg %p303
      // Predicated region
      $region41: #{tpu_custom_call.1} parent=5 // pred_check
        _
      $region42: #{tpu_custom_call.1} parent=5 // pred_check_branch
        %306 = sbr.rel (%p303) target = $region44
      $region43: #{tpu_custom_call.1} parent=5 // pred_region
        %s307 = ssub.s32 %s19, 1
        // Predicated region
        $region45: #{tpu_custom_call.1} parent=43 // pred_check
          %p308 = pneg %p85
        $region46: #{tpu_custom_call.1} parent=43 // pred_check_branch
          %310 = sbr.rel (%p308) target = $region48
        $region47: #{tpu_custom_call.1} parent=43 // pred_region
          %311 = dma.done [#allocation4], 2048
        $region48: #{tpu_custom_call.1} parent=43 // pred_fallthru
          _
        %s312 = sand.u32 %s24, 1
        %s313 = scalar_lea.sflag [#allocation7], %s312
        %s314 = sand.u32 %s98, 1
        %s315 = smul.addr %s314, 64
        %s316 = scalar_lea.vmem [#allocation6], %s315
        // Predicated region
        $region49: #{tpu_custom_call.1} parent=43 // pred_check
          %p317 = pneg %p111
        $region50: #{tpu_custom_call.1} parent=43 // pred_check_branch
          %319 = sbr.rel (%p317) target = $region52
        $region51: #{tpu_custom_call.1} parent=43 // pred_region
          %320 = dma.done %s313, 1024
        $region52: #{tpu_custom_call.1} parent=43 // pred_fallthru
          _
        // Predicated region
        $region53: #{tpu_custom_call.1} parent=43 // pred_check
          %p321 = pneg %p158
        $region54: #{tpu_custom_call.1} parent=43 // pred_check_branch
          %323 = sbr.rel (%p321) target = $region56
        $region55: #{tpu_custom_call.1} parent=43 // pred_region
          %324 = dma.done [#allocation7], 2048
        $region56: #{tpu_custom_call.1} parent=43 // pred_fallthru
          _
        %s325 = smul.u32 16, %s28
        %s326 = smul.u32 2, %s29
        %p327 = scmp.lt.s32.totalorder %s325, 31
        %s328 = scalar_select %p327, %s325, 31
        %p329 = scmp.lt.s32.totalorder %s326, 1
        %s330 = scalar_select %p329, %s326, 1
        %s331 = smul.addr %s328, 2
        %s332 = sadd.s32 %s330, %s331
        %s333 = smul.addr %s332, 4
        %s334 = scalar_lea.vmem %s0, %s333
        %p335 = pneg %p59
        %p336 = pneg %p56
        %p337 = pneg %p85
        %p338 = pneg %p82
        %s339 = sand.u32 %s24, 1
        %s340 = scalar_lea.sflag [#allocation7], %s339
        %s341 = sand.u32 %s98, 1
        %s342 = smul.addr %s341, 64
        %s343 = scalar_lea.vmem [#allocation6], %s342
        %p344 = pneg %p111
        %p345 = pneg %p108
        %s346 = smul.u32 16, %s28
        %p347 = scmp.lt.s32.totalorder %s346, 31
        %s348 = scalar_select %p347, %s346, 31
        %s349 = smul.addr %s348, 8
        %s350 = scalar_lea.vmem %s3, %s349
        %p351 = pneg %p137
        %p352 = pneg %p134
        %p353 = pneg %p158
        %p354 = pneg %p155
        %p355 = pneg %p179
        %p356 = pneg %p176
        %p357 = pneg %p205
        %p358 = pneg %p202
        %s359 = sand.u32 %s192, 1
        %s360 = scalar_lea.sflag [#allocation5], %s359
        %s361 = sand.u32 %s192, 1
        %s362 = smul.addr %s361, 128
        %s363 = scalar_lea.vmem [#allocation9], %s362
        %s364 = smul.u32 16, %s28
        %s365 = smul.u32 2, %s29
        %p366 = scmp.lt.s32.totalorder %s364, 31
        %s367 = scalar_select %p366, %s364, 31
        %p368 = scmp.lt.s32.totalorder %s365, 1
        %s369 = scalar_select %p368, %s365, 1
        %s370 = smul.addr %s367, 2
        %s371 = sadd.s32 %s369, %s370
        %s372 = smul.addr %s371, 4
        %s373 = scalar_lea.vmem %s0, %s372
        %s374 = smul.u32 16, %s28
        %s375 = smul.u32 2, %s29
        %s376 = smul.u32 32, %s29
        %s377 = smul.u32 16, %s28
        %s378 = smul.u32 16, %s28
        %p379 = scmp.lt.s32.totalorder %s378, 31
        %s380 = scalar_select %p379, %s378, 31
        %s381 = smul.addr %s380, 8
        %s382 = scalar_lea.vmem %s3, %s381
        %s383 = smul.u32 16, %s28
        %s384 = smul.u32 16, %s28
        %p386 = scmp.eq.s32.totalorder %s29, 0
        // Predicated region
        $region57: #{tpu_custom_call.1} parent=43 // pred_check
          %p387 = pneg %p386
        $region58: #{tpu_custom_call.1} parent=43 // pred_check_branch
          %389 = sbr.rel (%p387) target = $region60
        $region59: #{tpu_custom_call.1} parent=43 // pred_region
          %v390 = vld [vmem:[%s316] sm:$0xf]
          %v391 = vld [vmem:[%s316 + $0x4] sm:$0xf]
          %v392 = vld [vmem:[%s316 + $0x8] sm:$0xf]
          %v393 = vld [vmem:[%s316 + $0xc] sm:$0xf]
          %v394 = vld [vmem:[%s316 + $0x10] sm:$0xf]
          %v395 = vld [vmem:[%s316 + $0x14] sm:$0xf]
          %v396 = vld [vmem:[%s316 + $0x18] sm:$0xf]
          %v397 = vld [vmem:[%s316 + $0x1c] sm:$0xf]
          %v398 = vld [vmem:[%s316 + $0x20] sm:$0xf]
          %v399 = vld [vmem:[%s316 + $0x24] sm:$0xf]
          %v400 = vld [vmem:[%s316 + $0x28] sm:$0xf]
          %v401 = vld [vmem:[%s316 + $0x2c] sm:$0xf]
          %v402 = vld [vmem:[%s316 + $0x30] sm:$0xf]
          %v403 = vld [vmem:[%s316 + $0x34] sm:$0xf]
          %v404 = vld [vmem:[%s316 + $0x38] sm:$0xf]
          %v405 = vld [vmem:[%s316 + $0x3c] sm:$0xf]
          %v406 = vunpack.c.l.bf16 %v390
          %v407 = vunpack.c.l.bf16 %v391
          %v408 = vunpack.c.l.bf16 %v392
          %v409 = vunpack.c.l.bf16 %v393
          %v410 = vunpack.c.l.bf16 %v394
          %v411 = vunpack.c.l.bf16 %v395
          %v412 = vunpack.c.l.bf16 %v396
          %v413 = vunpack.c.l.bf16 %v397
          %v414 = vunpack.c.l.bf16 %v398
          %v415 = vunpack.c.l.bf16 %v399
          %v416 = vunpack.c.l.bf16 %v400
          %v417 = vunpack.c.l.bf16 %v401
          %v418 = vunpack.c.l.bf16 %v402
          %v419 = vunpack.c.l.bf16 %v403
          %v420 = vunpack.c.l.bf16 %v404
          %v421 = vunpack.c.l.bf16 %v405
          %422 = vst [vmem:[#allocation2] sm:$0xff] %v406
          %423 = vst [vmem:[#allocation2 + $0x8] sm:$0xff] %v407
          %424 = vst [vmem:[#allocation2 + $0x10] sm:$0xff] %v408
          %425 = vst [vmem:[#allocation2 + $0x18] sm:$0xff] %v409
          %426 = vst [vmem:[#allocation2 + $0x20] sm:$0xff] %v410
          %427 = vst [vmem:[#allocation2 + $0x28] sm:$0xff] %v411
          %428 = vst [vmem:[#allocation2 + $0x30] sm:$0xff] %v412
          %429 = vst [vmem:[#allocation2 + $0x38] sm:$0xff] %v413
          %430 = vst [vmem:[#allocation2 + $0x40] sm:$0xff] %v414
          %431 = vst [vmem:[#allocation2 + $0x48] sm:$0xff] %v415
          %432 = vst [vmem:[#allocation2 + $0x50] sm:$0xff] %v416
          %433 = vst [vmem:[#allocation2 + $0x58] sm:$0xff] %v417
          %434 = vst [vmem:[#allocation2 + $0x60] sm:$0xff] %v418
          %435 = vst [vmem:[#allocation2 + $0x68] sm:$0xff] %v419
          %436 = vst [vmem:[#allocation2 + $0x70] sm:$0xff] %v420
          %437 = vst [vmem:[#allocation2 + $0x78] sm:$0xff] %v421
        $region60: #{tpu_custom_call.1} parent=43 // pred_fallthru
          _
        %v438 = vld [vmem:[#allocation2] sm:$0xff]
        %v439 = vld [vmem:[#allocation2 + $0x8] sm:$0xff]
        %v440 = vld [vmem:[#allocation2 + $0x10] sm:$0xff]
        %v441 = vld [vmem:[#allocation2 + $0x18] sm:$0xff]
        %v442 = vld [vmem:[#allocation2 + $0x20] sm:$0xff]
        %v443 = vld [vmem:[#allocation2 + $0x28] sm:$0xff]
        %v444 = vld [vmem:[#allocation2 + $0x30] sm:$0xff]
        %v445 = vld [vmem:[#allocation2 + $0x38] sm:$0xff]
        %v446 = vld [vmem:[#allocation2 + $0x40] sm:$0xff]
        %v447 = vld [vmem:[#allocation2 + $0x48] sm:$0xff]
        %v448 = vld [vmem:[#allocation2 + $0x50] sm:$0xff]
        %v449 = vld [vmem:[#allocation2 + $0x58] sm:$0xff]
        %v450 = vld [vmem:[#allocation2 + $0x60] sm:$0xff]
        %v451 = vld [vmem:[#allocation2 + $0x68] sm:$0xff]
        %v452 = vld [vmem:[#allocation2 + $0x70] sm:$0xff]
        %v453 = vld [vmem:[#allocation2 + $0x78] sm:$0xff]
        %v454 = vld [vmem:[%s373] sm:$0xff]
        %v455 = vld [vmem:[%s373 + $0x8] sm:$0xff]
        %v456 = vld [vmem:[%s373 + $0x10] sm:$0xff]
        %v457 = vld [vmem:[%s373 + $0x18] sm:$0xff]
        %v458 = vld [vmem:[%s373 + $0x20] sm:$0xff]
        %v459 = vld [vmem:[%s373 + $0x28] sm:$0xff]
        %v460 = vld [vmem:[%s373 + $0x30] sm:$0xff]
        %v461 = vld [vmem:[%s373 + $0x38] sm:$0xff]
        %v462 = vld [vmem:[%s373 + $0x40] sm:$0xff]
        %v463 = vld [vmem:[%s373 + $0x48] sm:$0xff]
        %v464 = vld [vmem:[%s373 + $0x50] sm:$0xff]
        %v465 = vld [vmem:[%s373 + $0x58] sm:$0xff]
        %v466 = vld [vmem:[%s373 + $0x60] sm:$0xff]
        %v467 = vld [vmem:[%s373 + $0x68] sm:$0xff]
        %v468 = vld [vmem:[%s373 + $0x70] sm:$0xff]
        %v469 = vld [vmem:[%s373 + $0x78] sm:$0xff]
        %v470 = vld [vmem:[#allocation3] sm:$0xf]
        %v471 = vld [vmem:[#allocation3 + $0x4] sm:$0xf]
        %v472 = vld [vmem:[#allocation3 + $0x8] sm:$0xf]
        %v473 = vld [vmem:[#allocation3 + $0xc] sm:$0xf]
        %v474 = vld [vmem:[#allocation3 + $0x10] sm:$0xf]
        %v475 = vld [vmem:[#allocation3 + $0x14] sm:$0xf]
        %v476 = vld [vmem:[#allocation3 + $0x18] sm:$0xf]
        %v477 = vld [vmem:[#allocation3 + $0x1c] sm:$0xf]
        %v478 = vld [vmem:[#allocation3 + $0x20] sm:$0xf]
        %v479 = vld [vmem:[#allocation3 + $0x24] sm:$0xf]
        %v480 = vld [vmem:[#allocation3 + $0x28] sm:$0xf]
        %v481 = vld [vmem:[#allocation3 + $0x2c] sm:$0xf]
        %v482 = vld [vmem:[#allocation3 + $0x30] sm:$0xf]
        %v483 = vld [vmem:[#allocation3 + $0x34] sm:$0xf]
        %v484 = vld [vmem:[#allocation3 + $0x38] sm:$0xf]
        %v485 = vld [vmem:[#allocation3 + $0x3c] sm:$0xf]
        %v486 = vld [vmem:[#allocation3 + $0x40] sm:$0xf]
        %v487 = vld [vmem:[#allocation3 + $0x44] sm:$0xf]
        %v488 = vld [vmem:[#allocation3 + $0x48] sm:$0xf]
        %v489 = vld [vmem:[#allocation3 + $0x4c] sm:$0xf]
        %v490 = vld [vmem:[#allocation3 + $0x50] sm:$0xf]
        %v491 = vld [vmem:[#allocation3 + $0x54] sm:$0xf]
        %v492 = vld [vmem:[#allocation3 + $0x58] sm:$0xf]
        %v493 = vld [vmem:[#allocation3 + $0x5c] sm:$0xf]
        %v494 = vld [vmem:[#allocation3 + $0x60] sm:$0xf]
        %v495 = vld [vmem:[#allocation3 + $0x64] sm:$0xf]
        %v496 = vld [vmem:[#allocation3 + $0x68] sm:$0xf]
        %v497 = vld [vmem:[#allocation3 + $0x6c] sm:$0xf]
        %v498 = vld [vmem:[#allocation3 + $0x70] sm:$0xf]
        %v499 = vld [vmem:[#allocation3 + $0x74] sm:$0xf]
        %v500 = vld [vmem:[#allocation3 + $0x78] sm:$0xf]
        %v501 = vld [vmem:[#allocation3 + $0x7c] sm:$0xf]
        %v518 = vunpack.c.l.b16 %v454
        %v519 = vunpack.c.h.b16 %v454
        %v520 = vunpack.c.l.b16 %v455
        %v521 = vunpack.c.h.b16 %v455
        %v522 = vunpack.c.l.b16 %v456
        %v523 = vunpack.c.h.b16 %v456
        %v524 = vunpack.c.l.b16 %v457
        %v525 = vunpack.c.h.b16 %v457
        %v526 = vunpack.c.l.b16 %v458
        %v527 = vunpack.c.h.b16 %v458
        %v528 = vunpack.c.l.b16 %v459
        %v529 = vunpack.c.h.b16 %v459
        %v530 = vunpack.c.l.b16 %v460
        %v531 = vunpack.c.h.b16 %v460
        %v532 = vunpack.c.l.b16 %v461
        %v533 = vunpack.c.h.b16 %v461
        %v534 = vunpack.c.l.b16 %v462
        %v535 = vunpack.c.h.b16 %v462
        %v536 = vunpack.c.l.b16 %v463
        %v537 = vunpack.c.h.b16 %v463
        %v538 = vunpack.c.l.b16 %v464
        %v539 = vunpack.c.h.b16 %v464
        %v540 = vunpack.c.l.b16 %v465
        %v541 = vunpack.c.h.b16 %v465
        %v542 = vunpack.c.l.b16 %v466
        %v543 = vunpack.c.h.b16 %v466
        %v544 = vunpack.c.l.b16 %v467
        %v545 = vunpack.c.h.b16 %v467
        %v546 = vunpack.c.l.b16 %v468
        %v547 = vunpack.c.h.b16 %v468
        %v548 = vunpack.c.l.b16 %v469
        %v549 = vunpack.c.h.b16 %v469
        %v550 = vpack.c.b16 %v520, %v518
        %v551 = vpack.c.b16 %v521, %v519
        %v552 = vpack.c.b16 %v524, %v522
        %v553 = vpack.c.b16 %v525, %v523
        %v554 = vpack.c.b16 %v528, %v526
        %v555 = vpack.c.b16 %v529, %v527
        %v556 = vpack.c.b16 %v532, %v530
        %v557 = vpack.c.b16 %v533, %v531
        %v558 = vpack.c.b16 %v536, %v534
        %v559 = vpack.c.b16 %v537, %v535
        %v560 = vpack.c.b16 %v540, %v538
        %v561 = vpack.c.b16 %v541, %v539
        %v562 = vpack.c.b16 %v544, %v542
        %v563 = vpack.c.b16 %v545, %v543
        %v564 = vpack.c.b16 %v548, %v546
        %v565 = vpack.c.b16 %v549, %v547
        %v614 = vunpack.c.l.b16 %v470
        %v615 = vunpack.c.l.b16 %v471
        %v616 = vunpack.c.l.b16 %v472
        %v617 = vunpack.c.l.b16 %v473
        %v618 = vunpack.c.l.b16 %v474
        %v619 = vunpack.c.l.b16 %v475
        %v620 = vunpack.c.l.b16 %v476
        %v621 = vunpack.c.l.b16 %v477
        %v622 = vunpack.c.l.b16 %v478
        %v623 = vunpack.c.l.b16 %v479
        %v624 = vunpack.c.l.b16 %v480
        %v625 = vunpack.c.l.b16 %v481
        %v626 = vunpack.c.l.b16 %v482
        %v627 = vunpack.c.l.b16 %v483
        %v628 = vunpack.c.l.b16 %v484
        %v629 = vunpack.c.l.b16 %v485
        %v630 = vunpack.c.l.b16 %v486
        %v631 = vunpack.c.l.b16 %v487
        %v632 = vunpack.c.l.b16 %v488
        %v633 = vunpack.c.l.b16 %v489
        %v634 = vunpack.c.l.b16 %v490
        %v635 = vunpack.c.l.b16 %v491
        %v636 = vunpack.c.l.b16 %v492
        %v637 = vunpack.c.l.b16 %v493
        %v638 = vunpack.c.l.b16 %v494
        %v639 = vunpack.c.l.b16 %v495
        %v640 = vunpack.c.l.b16 %v496
        %v641 = vunpack.c.l.b16 %v497
        %v642 = vunpack.c.l.b16 %v498
        %v643 = vunpack.c.l.b16 %v499
        %v644 = vunpack.c.l.b16 %v500
        %v645 = vunpack.c.l.b16 %v501
        %v646 = vpack.c.b16 %v615, %v614
        %v647 = vpack.c.b16 %v617, %v616
        %v648 = vpack.c.b16 %v619, %v618
        %v649 = vpack.c.b16 %v621, %v620
        %v650 = vpack.c.b16 %v623, %v622
        %v651 = vpack.c.b16 %v625, %v624
        %v652 = vpack.c.b16 %v627, %v626
        %v653 = vpack.c.b16 %v629, %v628
        %v654 = vpack.c.b16 %v631, %v630
        %v655 = vpack.c.b16 %v633, %v632
        %v656 = vpack.c.b16 %v635, %v634
        %v657 = vpack.c.b16 %v637, %v636
        %v658 = vpack.c.b16 %v639, %v638
        %v659 = vpack.c.b16 %v641, %v640
        %v660 = vpack.c.b16 %v643, %v642
        %v661 = vpack.c.b16 %v645, %v644
        %678 = vmatprep.subr.bf16.mxu0 0
        %679 = vmatpush1.bf16.msra.mxu0 %v653
        %680 = vmatprep.subr.bf16.mxu0 0
        %681 = vmatpush1.bf16.msra.mxu0 %v652
        %682 = vmatprep.subr.bf16.mxu0 0
        %683 = vmatpush1.bf16.msra.mxu0 %v651
        %684 = vmatprep.subr.bf16.mxu0 0
        %685 = vmatpush1.bf16.msra.mxu0 %v650
        %686 = vmatprep.subr.bf16.mxu0 0
        %687 = vmatpush1.bf16.msra.mxu0 %v649
        %688 = vmatprep.subr.bf16.mxu0 0
        %689 = vmatpush1.bf16.msra.mxu0 %v648
        %690 = vmatprep.subr.bf16.mxu0 0
        %691 = vmatpush1.bf16.msra.mxu0 %v647
        %692 = vmatprep.subr.bf16.mxu0 0
        %693 = vmatpush1.bf16.msra.mxu0 %v646
        %694 = vmatprep.subr.bf16.mxu0 0
        %695 = vmatpush2.bf16.msra.mxu0 %v661
        %696 = vmatprep.subr.bf16.mxu0 0
        %697 = vmatpush2.bf16.msra.mxu0 %v660
        %698 = vmatprep.subr.bf16.mxu0 0
        %699 = vmatpush2.bf16.msra.mxu0 %v659
        %700 = vmatprep.subr.bf16.mxu0 0
        %701 = vmatpush2.bf16.msra.mxu0 %v658
        %702 = vmatprep.subr.bf16.mxu0 0
        %703 = vmatpush2.bf16.msra.mxu0 %v657
        %704 = vmatprep.subr.bf16.mxu0 0
        %705 = vmatpush2.bf16.msra.mxu0 %v656
        %706 = vmatprep.subr.bf16.mxu0 0
        %707 = vmatpush2.bf16.msra.mxu0 %v655
        %708 = vmatprep.subr.bf16.mxu0 0
        %709 = vmatpush2.bf16.msra.mxu0 %v654
        %710 = vmatprep.mubr.bf16.mxu0 %v551
        %711 = vmatmul.mubr.bf16.gmra.mxu0 %v550
        %v712 = vpop.f32.mrf.mxu0
        %v713 = vadd.f32 0.0, %v712
        %v714 = vpop.f32.mrf.mxu0
        %v715 = vpop.f32.mrf.mxu0
        %v716 = vadd.f32 0.0, %v715
        %v717 = vpop.f32.mrf.mxu0
        %718 = vmatprep.mubr.bf16.mxu0 %v553
        %719 = vmatmul.mubr.bf16.gmra.mxu0 %v552
        %v720 = vpop.f32.mrf.mxu0
        %v721 = vadd.f32 0.0, %v720
        %v722 = vpop.f32.mrf.mxu0
        %v723 = vpop.f32.mrf.mxu0
        %v724 = vadd.f32 0.0, %v723
        %v725 = vpop.f32.mrf.mxu0
        %726 = vmatprep.mubr.bf16.mxu0 %v555
        %727 = vmatmul.mubr.bf16.gmra.mxu0 %v554
        %v728 = vpop.f32.mrf.mxu0
        %v729 = vadd.f32 0.0, %v728
        %v730 = vpop.f32.mrf.mxu0
        %v731 = vpop.f32.mrf.mxu0
        %v732 = vadd.f32 0.0, %v731
        %v733 = vpop.f32.mrf.mxu0
        %734 = vmatprep.mubr.bf16.mxu0 %v557
        %735 = vmatmul.mubr.bf16.gmra.mxu0 %v556
        %v736 = vpop.f32.mrf.mxu0
        %v737 = vadd.f32 0.0, %v736
        %v738 = vpop.f32.mrf.mxu0
        %v739 = vpop.f32.mrf.mxu0
        %v740 = vadd.f32 0.0, %v739
        %v741 = vpop.f32.mrf.mxu0
        %742 = vmatprep.mubr.bf16.mxu0 %v559
        %743 = vmatmul.mubr.bf16.gmra.mxu0 %v558
        %v744 = vpop.f32.mrf.mxu0
        %v745 = vadd.f32 0.0, %v744
        %v746 = vpop.f32.mrf.mxu0
        %v747 = vpop.f32.mrf.mxu0
        %v748 = vadd.f32 0.0, %v747
        %v749 = vpop.f32.mrf.mxu0
        %750 = vmatprep.mubr.bf16.mxu0 %v561
        %751 = vmatmul.mubr.bf16.gmra.mxu0 %v560
        %v752 = vpop.f32.mrf.mxu0
        %v753 = vadd.f32 0.0, %v752
        %v754 = vpop.f32.mrf.mxu0
        %v755 = vpop.f32.mrf.mxu0
        %v756 = vadd.f32 0.0, %v755
        %v757 = vpop.f32.mrf.mxu0
        %758 = vmatprep.mubr.bf16.mxu0 %v563
        %759 = vmatmul.mubr.bf16.gmra.mxu0 %v562
        %v760 = vpop.f32.mrf.mxu0
        %v761 = vadd.f32 0.0, %v760
        %v762 = vpop.f32.mrf.mxu0
        %v763 = vpop.f32.mrf.mxu0
        %v764 = vadd.f32 0.0, %v763
        %v765 = vpop.f32.mrf.mxu0
        %766 = vmatprep.mubr.bf16.mxu0 %v565
        %767 = vmatmul.mubr.bf16.gmra.mxu0 %v564
        %v768 = vpop.f32.mrf.mxu0
        %v769 = vadd.f32 0.0, %v768
        %v770 = vpop.f32.mrf.mxu0
        %v771 = vpop.f32.mrf.mxu0
        %v772 = vadd.f32 0.0, %v771
        %v773 = vpop.f32.mrf.mxu0
        %774 = vdwg.mxu0
        %v775 = vadd.f32 %v438, %v713
        %v776 = vadd.f32 %v439, %v716
        %v777 = vadd.f32 %v440, %v721
        %v778 = vadd.f32 %v441, %v724
        %v779 = vadd.f32 %v442, %v729
        %v780 = vadd.f32 %v443, %v732
        %v781 = vadd.f32 %v444, %v737
        %v782 = vadd.f32 %v445, %v740
        %v783 = vadd.f32 %v446, %v745
        %v784 = vadd.f32 %v447, %v748
        %v785 = vadd.f32 %v448, %v753
        %v786 = vadd.f32 %v449, %v756
        %v787 = vadd.f32 %v450, %v761
        %v788 = vadd.f32 %v451, %v764
        %v789 = vadd.f32 %v452, %v769
        %v790 = vadd.f32 %v453, %v772
        %791 = vst [vmem:[#allocation2] sm:$0xff] %v775
        %792 = vst [vmem:[#allocation2 + $0x8] sm:$0xff] %v776
        %793 = vst [vmem:[#allocation2 + $0x10] sm:$0xff] %v777
        %794 = vst [vmem:[#allocation2 + $0x18] sm:$0xff] %v778
        %795 = vst [vmem:[#allocation2 + $0x20] sm:$0xff] %v779
        %796 = vst [vmem:[#allocation2 + $0x28] sm:$0xff] %v780
        %797 = vst [vmem:[#allocation2 + $0x30] sm:$0xff] %v781
        %798 = vst [vmem:[#allocation2 + $0x38] sm:$0xff] %v782
        %799 = vst [vmem:[#allocation2 + $0x40] sm:$0xff] %v783
        %800 = vst [vmem:[#allocation2 + $0x48] sm:$0xff] %v784
        %801 = vst [vmem:[#allocation2 + $0x50] sm:$0xff] %v785
        %802 = vst [vmem:[#allocation2 + $0x58] sm:$0xff] %v786
        %803 = vst [vmem:[#allocation2 + $0x60] sm:$0xff] %v787
        %804 = vst [vmem:[#allocation2 + $0x68] sm:$0xff] %v788
        %805 = vst [vmem:[#allocation2 + $0x70] sm:$0xff] %v789
        %806 = vst [vmem:[#allocation2 + $0x78] sm:$0xff] %v790
        // Predicated region
        $region61: #{tpu_custom_call.1} parent=43 // pred_check
          %p807 = pneg %p386
        $region62: #{tpu_custom_call.1} parent=43 // pred_check_branch
          %809 = sbr.rel (%p807) target = $region64
        $region63: #{tpu_custom_call.1} parent=43 // pred_region
          %v810 = vld [vmem:[#allocation2] sm:$0xff]
          %v811 = vld [vmem:[#allocation2 + $0x8] sm:$0xff]
          %v812 = vld [vmem:[#allocation2 + $0x10] sm:$0xff]
          %v813 = vld [vmem:[#allocation2 + $0x18] sm:$0xff]
          %v814 = vld [vmem:[#allocation2 + $0x20] sm:$0xff]
          %v815 = vld [vmem:[#allocation2 + $0x28] sm:$0xff]
          %v816 = vld [vmem:[#allocation2 + $0x30] sm:$0xff]
          %v817 = vld [vmem:[#allocation2 + $0x38] sm:$0xff]
          %v818 = vld [vmem:[#allocation2 + $0x40] sm:$0xff]
          %v819 = vld [vmem:[#allocation2 + $0x48] sm:$0xff]
          %v820 = vld [vmem:[#allocation2 + $0x50] sm:$0xff]
          %v821 = vld [vmem:[#allocation2 + $0x58] sm:$0xff]
          %v822 = vld [vmem:[#allocation2 + $0x60] sm:$0xff]
          %v823 = vld [vmem:[#allocation2 + $0x68] sm:$0xff]
          %v824 = vld [vmem:[#allocation2 + $0x70] sm:$0xff]
          %v825 = vld [vmem:[#allocation2 + $0x78] sm:$0xff]
          %v826 = vld [vmem:[%s382] sm:$0xff]
          %v827 = vld [vmem:[%s382 + $0x8] sm:$0xff]
          %v828 = vld [vmem:[%s382 + $0x10] sm:$0xff]
          %v829 = vld [vmem:[%s382 + $0x18] sm:$0xff]
          %v830 = vld [vmem:[%s382 + $0x20] sm:$0xff]
          %v831 = vld [vmem:[%s382 + $0x28] sm:$0xff]
          %v832 = vld [vmem:[%s382 + $0x30] sm:$0xff]
          %v833 = vld [vmem:[%s382 + $0x38] sm:$0xff]
          %v834 = vld [vmem:[%s382 + $0x40] sm:$0xff]
          %v835 = vld [vmem:[%s382 + $0x48] sm:$0xff]
          %v836 = vld [vmem:[%s382 + $0x50] sm:$0xff]
          %v837 = vld [vmem:[%s382 + $0x58] sm:$0xff]
          %v838 = vld [vmem:[%s382 + $0x60] sm:$0xff]
          %v839 = vld [vmem:[%s382 + $0x68] sm:$0xff]
          %v840 = vld [vmem:[%s382 + $0x70] sm:$0xff]
          %v841 = vld [vmem:[%s382 + $0x78] sm:$0xff]
          %843 = vset.pattern.permute.xlu0 0
          %844 = vperm.xlu0 %843, %v826
          %v845 = vpop.permute.xlu0 %844
          %848 = vset.pattern.permute.xlu0 0
          %849 = vperm.xlu0 %848, %v827
          %v850 = vpop.permute.xlu0 %849
          %853 = vset.pattern.permute.xlu0 0
          %854 = vperm.xlu0 %853, %v828
          %v855 = vpop.permute.xlu0 %854
          %858 = vset.pattern.permute.xlu0 0
          %859 = vperm.xlu0 %858, %v829
          %v860 = vpop.permute.xlu0 %859
          %863 = vset.pattern.permute.xlu0 0
          %864 = vperm.xlu0 %863, %v830
          %v865 = vpop.permute.xlu0 %864
          %868 = vset.pattern.permute.xlu0 0
          %869 = vperm.xlu0 %868, %v831
          %v870 = vpop.permute.xlu0 %869
          %873 = vset.pattern.permute.xlu0 0
          %874 = vperm.xlu0 %873, %v832
          %v875 = vpop.permute.xlu0 %874
          %878 = vset.pattern.permute.xlu0 0
          %879 = vperm.xlu0 %878, %v833
          %v880 = vpop.permute.xlu0 %879
          %883 = vset.pattern.permute.xlu0 0
          %884 = vperm.xlu0 %883, %v834
          %v885 = vpop.permute.xlu0 %884
          %888 = vset.pattern.permute.xlu0 0
          %889 = vperm.xlu0 %888, %v835
          %v890 = vpop.permute.xlu0 %889
          %893 = vset.pattern.permute.xlu0 0
          %894 = vperm.xlu0 %893, %v836
          %v895 = vpop.permute.xlu0 %894
          %898 = vset.pattern.permute.xlu0 0
          %899 = vperm.xlu0 %898, %v837
          %v900 = vpop.permute.xlu0 %899
          %903 = vset.pattern.permute.xlu0 0
          %904 = vperm.xlu0 %903, %v838
          %v905 = vpop.permute.xlu0 %904
          %908 = vset.pattern.permute.xlu0 0
          %909 = vperm.xlu0 %908, %v839
          %v910 = vpop.permute.xlu0 %909
          %913 = vset.pattern.permute.xlu0 0
          %914 = vperm.xlu0 %913, %v840
          %v915 = vpop.permute.xlu0 %914
          %918 = vset.pattern.permute.xlu0 0
          %919 = vperm.xlu0 %918, %v841
          %v920 = vpop.permute.xlu0 %919
          %v922 = vmul.f32 %v810, %v845
          %v923 = vmul.f32 %v811, %v850
          %v924 = vmul.f32 %v812, %v855
          %v925 = vmul.f32 %v813, %v860
          %v926 = vmul.f32 %v814, %v865
          %v927 = vmul.f32 %v815, %v870
          %v928 = vmul.f32 %v816, %v875
          %v929 = vmul.f32 %v817, %v880
          %v930 = vmul.f32 %v818, %v885
          %v931 = vmul.f32 %v819, %v890
          %v932 = vmul.f32 %v820, %v895
          %v933 = vmul.f32 %v821, %v900
          %v934 = vmul.f32 %v822, %v905
          %v935 = vmul.f32 %v823, %v910
          %v936 = vmul.f32 %v824, %v915
          %v937 = vmul.f32 %v825, %v920
          %938 = vst [vmem:[#allocation2] sm:$0xff] %v922
          %939 = vst [vmem:[#allocation2 + $0x8] sm:$0xff] %v923
          %940 = vst [vmem:[#allocation2 + $0x10] sm:$0xff] %v924
          %941 = vst [vmem:[#allocation2 + $0x18] sm:$0xff] %v925
          %942 = vst [vmem:[#allocation2 + $0x20] sm:$0xff] %v926
          %943 = vst [vmem:[#allocation2 + $0x28] sm:$0xff] %v927
          %944 = vst [vmem:[#allocation2 + $0x30] sm:$0xff] %v928
          %945 = vst [vmem:[#allocation2 + $0x38] sm:$0xff] %v929
          %946 = vst [vmem:[#allocation2 + $0x40] sm:$0xff] %v930
          %947 = vst [vmem:[#allocation2 + $0x48] sm:$0xff] %v931
          %948 = vst [vmem:[#allocation2 + $0x50] sm:$0xff] %v932
          %949 = vst [vmem:[#allocation2 + $0x58] sm:$0xff] %v933
          %950 = vst [vmem:[#allocation2 + $0x60] sm:$0xff] %v934
          %951 = vst [vmem:[#allocation2 + $0x68] sm:$0xff] %v935
          %952 = vst [vmem:[#allocation2 + $0x70] sm:$0xff] %v936
          %953 = vst [vmem:[#allocation2 + $0x78] sm:$0xff] %v937
          %v954 = vld [vmem:[#allocation2] sm:$0xff]
          %v955 = vld [vmem:[#allocation2 + $0x8] sm:$0xff]
          %v956 = vld [vmem:[#allocation2 + $0x10] sm:$0xff]
          %v957 = vld [vmem:[#allocation2 + $0x18] sm:$0xff]
          %v958 = vld [vmem:[#allocation2 + $0x20] sm:$0xff]
          %v959 = vld [vmem:[#allocation2 + $0x28] sm:$0xff]
          %v960 = vld [vmem:[#allocation2 + $0x30] sm:$0xff]
          %v961 = vld [vmem:[#allocation2 + $0x38] sm:$0xff]
          %v962 = vld [vmem:[#allocation2 + $0x40] sm:$0xff]
          %v963 = vld [vmem:[#allocation2 + $0x48] sm:$0xff]
          %v964 = vld [vmem:[#allocation2 + $0x50] sm:$0xff]
          %v965 = vld [vmem:[#allocation2 + $0x58] sm:$0xff]
          %v966 = vld [vmem:[#allocation2 + $0x60] sm:$0xff]
          %v967 = vld [vmem:[#allocation2 + $0x68] sm:$0xff]
          %v968 = vld [vmem:[#allocation2 + $0x70] sm:$0xff]
          %v969 = vld [vmem:[#allocation2 + $0x78] sm:$0xff]
          %v970 = vld [vmem:[#allocation8] sm:$0xff]
          %v971 = vld [vmem:[#allocation8 + $0x8] sm:$0xff]
          %v972 = vld [vmem:[#allocation8 + $0x10] sm:$0xff]
          %v973 = vld [vmem:[#allocation8 + $0x18] sm:$0xff]
          %v974 = vld [vmem:[#allocation8 + $0x20] sm:$0xff]
          %v975 = vld [vmem:[#allocation8 + $0x28] sm:$0xff]
          %v976 = vld [vmem:[#allocation8 + $0x30] sm:$0xff]
          %v977 = vld [vmem:[#allocation8 + $0x38] sm:$0xff]
          %v978 = vld [vmem:[#allocation8 + $0x40] sm:$0xff]
          %v979 = vld [vmem:[#allocation8 + $0x48] sm:$0xff]
          %v980 = vld [vmem:[#allocation8 + $0x50] sm:$0xff]
          %v981 = vld [vmem:[#allocation8 + $0x58] sm:$0xff]
          %v982 = vld [vmem:[#allocation8 + $0x60] sm:$0xff]
          %v983 = vld [vmem:[#allocation8 + $0x68] sm:$0xff]
          %v984 = vld [vmem:[#allocation8 + $0x70] sm:$0xff]
          %v985 = vld [vmem:[#allocation8 + $0x78] sm:$0xff]
          %v986 = vld [vmem:[%s5] sm:$0x1]
          %v988 = vlaneseq
          %v989 = vshrl.u32 %v988, 7
          %v990 = vsub.s32 0, %v989
          %v991 = vrot.slane %v986, %v990
          %993 = vmatprep.subr.mxu0 0.0
          %994 = vmatpush1.msra.mxu0 %v985
          %995 = vmatprep.subr.mxu0 0.0
          %996 = vmatpush1.msra.mxu0 %v984
          %997 = vmatprep.subr.mxu0 0.0
          %998 = vmatpush1.msra.mxu0 %v983
          %999 = vmatprep.subr.mxu0 0.0
          %1000 = vmatpush1.msra.mxu0 %v982
          %1001 = vmatprep.subr.mxu0 0.0
          %1002 = vmatpush1.msra.mxu0 %v981
          %1003 = vmatprep.subr.mxu0 0.0
          %1004 = vmatpush1.msra.mxu0 %v980
          %1005 = vmatprep.subr.mxu0 0.0
          %1006 = vmatpush1.msra.mxu0 %v979
          %1007 = vmatprep.subr.mxu0 0.0
          %1008 = vmatpush1.msra.mxu0 %v978
          %1009 = vmatprep.subr.mxu0 0.0
          %1010 = vmatpush1.msra.mxu0 %v977
          %1011 = vmatprep.subr.mxu0 0.0
          %1012 = vmatpush1.msra.mxu0 %v976
          %1013 = vmatprep.subr.mxu0 0.0
          %1014 = vmatpush1.msra.mxu0 %v975
          %1015 = vmatprep.subr.mxu0 0.0
          %1016 = vmatpush1.msra.mxu0 %v974
          %1017 = vmatprep.subr.mxu0 0.0
          %1018 = vmatpush1.msra.mxu0 %v973
          %1019 = vmatprep.subr.mxu0 0.0
          %1020 = vmatpush1.msra.mxu0 %v972
          %1021 = vmatprep.subr.mxu0 0.0
          %1022 = vmatpush1.msra.mxu0 %v971
          %1023 = vmatprep.subr.mxu0 0.0
          %1024 = vmatpush1.msra.mxu0 %v970
          %1025 = vmatprep.subr.mxu0 0.0
          %1026 = vmatpush2.msra.mxu0 0.0
          %1027 = vmatprep.subr.mxu0 0.0
          %1028 = vmatpush2.msra.mxu0 0.0
          %1029 = vmatprep.subr.mxu0 0.0
          %1030 = vmatpush2.msra.mxu0 0.0
          %1031 = vmatprep.subr.mxu0 0.0
          %1032 = vmatpush2.msra.mxu0 0.0
          %1033 = vmatprep.subr.mxu0 0.0
          %1034 = vmatpush2.msra.mxu0 0.0
          %1035 = vmatprep.subr.mxu0 0.0
          %1036 = vmatpush2.msra.mxu0 0.0
          %1037 = vmatprep.subr.mxu0 0.0
          %1038 = vmatpush2.msra.mxu0 0.0
          %1039 = vmatprep.subr.mxu0 0.0
          %1040 = vmatpush2.msra.mxu0 0.0
          %1041 = vmatprep.subr.mxu0 0.0
          %1042 = vmatpush2.msra.mxu0 0.0
          %1043 = vmatprep.subr.mxu0 0.0
          %1044 = vmatpush2.msra.mxu0 0.0
          %1045 = vmatprep.subr.mxu0 0.0
          %1046 = vmatpush2.msra.mxu0 0.0
          %1047 = vmatprep.subr.mxu0 0.0
          %1048 = vmatpush2.msra.mxu0 0.0
          %1049 = vmatprep.subr.mxu0 0.0
          %1050 = vmatpush2.msra.mxu0 0.0
          %1051 = vmatprep.subr.mxu0 0.0
          %1052 = vmatpush2.msra.mxu0 0.0
          %1053 = vmatprep.subr.mxu0 0.0
          %1054 = vmatpush2.msra.mxu0 0.0
          %1055 = vmatprep.subr.mxu0 0.0
          %1056 = vmatpush2.msra.mxu0 0.0
          %1057 = vmatprep.mubr.f32.mxu0 0.0
          %1058 = vmatmul.mubr.f32.gmra.mxu0 %v954
          %v1059 = vpop.f32.mrf.mxu0
          %v1060 = vadd.f32 %v991, %v1059
          %v1061 = vpop.f32.mrf.mxu0
          %1062 = vmatprep.mubr.f32.mxu0 0.0
          %1063 = vmatmul.mubr.f32.gmra.mxu0 %v955
          %v1064 = vpop.f32.mrf.mxu0
          %v1065 = vadd.f32 %v991, %v1064
          %v1066 = vpop.f32.mrf.mxu0
          %1067 = vmatprep.mubr.f32.mxu0 0.0
          %1068 = vmatmul.mubr.f32.gmra.mxu0 %v956
          %v1069 = vpop.f32.mrf.mxu0
          %v1070 = vadd.f32 %v991, %v1069
          %v1071 = vpop.f32.mrf.mxu0
          %1072 = vmatprep.mubr.f32.mxu0 0.0
          %1073 = vmatmul.mubr.f32.gmra.mxu0 %v957
          %v1074 = vpop.f32.mrf.mxu0
          %v1075 = vadd.f32 %v991, %v1074
          %v1076 = vpop.f32.mrf.mxu0
          %1077 = vmatprep.mubr.f32.mxu0 0.0
          %1078 = vmatmul.mubr.f32.gmra.mxu0 %v958
          %v1079 = vpop.f32.mrf.mxu0
          %v1080 = vadd.f32 %v991, %v1079
          %v1081 = vpop.f32.mrf.mxu0
          %1082 = vmatprep.mubr.f32.mxu0 0.0
          %1083 = vmatmul.mubr.f32.gmra.mxu0 %v959
          %v1084 = vpop.f32.mrf.mxu0
          %v1085 = vadd.f32 %v991, %v1084
          %v1086 = vpop.f32.mrf.mxu0
          %1087 = vmatprep.mubr.f32.mxu0 0.0
          %1088 = vmatmul.mubr.f32.gmra.mxu0 %v960
          %v1089 = vpop.f32.mrf.mxu0
          %v1090 = vadd.f32 %v991, %v1089
          %v1091 = vpop.f32.mrf.mxu0
          %1092 = vmatprep.mubr.f32.mxu0 0.0
          %1093 = vmatmul.mubr.f32.gmra.mxu0 %v961
          %v1094 = vpop.f32.mrf.mxu0
          %v1095 = vadd.f32 %v991, %v1094
          %v1096 = vpop.f32.mrf.mxu0
          %1097 = vmatprep.mubr.f32.mxu0 0.0
          %1098 = vmatmul.mubr.f32.gmra.mxu0 %v962
          %v1099 = vpop.f32.mrf.mxu0
          %v1100 = vadd.f32 %v991, %v1099
          %v1101 = vpop.f32.mrf.mxu0
          %1102 = vmatprep.mubr.f32.mxu0 0.0
          %1103 = vmatmul.mubr.f32.gmra.mxu0 %v963
          %v1104 = vpop.f32.mrf.mxu0
          %v1105 = vadd.f32 %v991, %v1104
          %v1106 = vpop.f32.mrf.mxu0
          %1107 = vmatprep.mubr.f32.mxu0 0.0
          %1108 = vmatmul.mubr.f32.gmra.mxu0 %v964
          %v1109 = vpop.f32.mrf.mxu0
          %v1110 = vadd.f32 %v991, %v1109
          %v1111 = vpop.f32.mrf.mxu0
          %1112 = vmatprep.mubr.f32.mxu0 0.0
          %1113 = vmatmul.mubr.f32.gmra.mxu0 %v965
          %v1114 = vpop.f32.mrf.mxu0
          %v1115 = vadd.f32 %v991, %v1114
          %v1116 = vpop.f32.mrf.mxu0
          %1117 = vmatprep.mubr.f32.mxu0 0.0
          %1118 = vmatmul.mubr.f32.gmra.mxu0 %v966
          %v1119 = vpop.f32.mrf.mxu0
          %v1120 = vadd.f32 %v991, %v1119
          %v1121 = vpop.f32.mrf.mxu0
          %1122 = vmatprep.mubr.f32.mxu0 0.0
          %1123 = vmatmul.mubr.f32.gmra.mxu0 %v967
          %v1124 = vpop.f32.mrf.mxu0
          %v1125 = vadd.f32 %v991, %v1124
          %v1126 = vpop.f32.mrf.mxu0
          %1127 = vmatprep.mubr.f32.mxu0 0.0
          %1128 = vmatmul.mubr.f32.gmra.mxu0 %v968
          %v1129 = vpop.f32.mrf.mxu0
          %v1130 = vadd.f32 %v991, %v1129
          %v1131 = vpop.f32.mrf.mxu0
          %1132 = vmatprep.mubr.f32.mxu0 0.0
          %1133 = vmatmul.mubr.f32.gmra.mxu0 %v969
          %v1134 = vpop.f32.mrf.mxu0
          %v1135 = vadd.f32 %v991, %v1134
          %v1136 = vpop.f32.mrf.mxu0
          %1137 = vdwg.mxu0
          %v1138 = vmax.f32 %v1060, 0.0
          %v1139 = vmax.f32 %v1065, 0.0
          %v1140 = vmax.f32 %v1070, 0.0
          %v1141 = vmax.f32 %v1075, 0.0
          %v1142 = vmax.f32 %v1080, 0.0
          %v1143 = vmax.f32 %v1085, 0.0
          %v1144 = vmax.f32 %v1090, 0.0
          %v1145 = vmax.f32 %v1095, 0.0
          %v1146 = vmax.f32 %v1100, 0.0
          %v1147 = vmax.f32 %v1105, 0.0
          %v1148 = vmax.f32 %v1110, 0.0
          %v1149 = vmax.f32 %v1115, 0.0
          %v1150 = vmax.f32 %v1120, 0.0
          %v1151 = vmax.f32 %v1125, 0.0
          %v1152 = vmax.f32 %v1130, 0.0
          %v1153 = vmax.f32 %v1135, 0.0
          %1154 = vst [vmem:[%s363] sm:$0xff] %v1138
          %1155 = vst [vmem:[%s363 + $0x8] sm:$0xff] %v1139
          %1156 = vst [vmem:[%s363 + $0x10] sm:$0xff] %v1140
          %1157 = vst [vmem:[%s363 + $0x18] sm:$0xff] %v1141
          %1158 = vst [vmem:[%s363 + $0x20] sm:$0xff] %v1142
          %1159 = vst [vmem:[%s363 + $0x28] sm:$0xff] %v1143
          %1160 = vst [vmem:[%s363 + $0x30] sm:$0xff] %v1144
          %1161 = vst [vmem:[%s363 + $0x38] sm:$0xff] %v1145
          %1162 = vst [vmem:[%s363 + $0x40] sm:$0xff] %v1146
          %1163 = vst [vmem:[%s363 + $0x48] sm:$0xff] %v1147
          %1164 = vst [vmem:[%s363 + $0x50] sm:$0xff] %v1148
          %1165 = vst [vmem:[%s363 + $0x58] sm:$0xff] %v1149
          %1166 = vst [vmem:[%s363 + $0x60] sm:$0xff] %v1150
          %1167 = vst [vmem:[%s363 + $0x68] sm:$0xff] %v1151
          %1168 = vst [vmem:[%s363 + $0x70] sm:$0xff] %v1152
          %1169 = vst [vmem:[%s363 + $0x78] sm:$0xff] %v1153
        $region64: #{tpu_custom_call.1} parent=43 // pred_fallthru
          _
        %s1170 = sand.u32 %s192, 1
        %s1171 = scalar_lea.sflag [#allocation5], %s1170
        %s1172 = sand.u32 %s192, 1
        %s1173 = smul.addr %s1172, 128
        %s1174 = scalar_lea.vmem [#allocation9], %s1173
        // Predicated region
        $region65: #{tpu_custom_call.1} parent=43 // pred_check
          %p1175 = pneg %p202
        $region66: #{tpu_custom_call.1} parent=43 // pred_check_branch
          %1177 = sbr.rel (%p1175) target = $region68
        $region67: #{tpu_custom_call.1} parent=43 // pred_region
          %s1178 = smul.u32 16, %s28
          %s1180 = ssub.s32 2048, 2048
          %1181 = vsyncadd %s1171, %s1180
          %s1182 = smul.addr %s1178, 128
          %s1183 = scalar_lea.hbm %s6, %s1182
          %s1184 = sshll.u32 %s1174, 4
          %s1185 = int_to_ptr.vmem [resolvable:$true] %s1184
          %1190 = dma.vmem_to_hbm [thread:$0]  %s1185, 2048, %s1183, %s1171, 128, 128, 8
        $region68: #{tpu_custom_call.1} parent=43 // pred_fallthru
          _
      $region44: #{tpu_custom_call.1} parent=5 // pred_fallthru
        _
      %p1191 = scmp.le.s32.totalorder 2, %s19
      // Predicated region
      $region69: #{tpu_custom_call.1} parent=5 // pred_check
        %p1192 = pneg %p1191
      $region70: #{tpu_custom_call.1} parent=5 // pred_check_branch
        %1194 = sbr.rel (%p1192) target = $region72
      $region71: #{tpu_custom_call.1} parent=5 // pred_region
        %s1195 = ssub.s32 %s19, 2
        // Predicated region
        $region73: #{tpu_custom_call.1} parent=71 // pred_check
          %p1196 = pneg %p208
        $region74: #{tpu_custom_call.1} parent=71 // pred_check_branch
          %1198 = sbr.rel (%p1196) target = $region76
        $region75: #{tpu_custom_call.1} parent=71 // pred_region
          %s1199 = sand.u32 %s193, 1
          %s1200 = scalar_lea.sflag [#allocation5], %s1199
          %s1201 = sand.u32 %s193, 1
          %s1202 = smul.addr %s1201, 128
          %s1203 = scalar_lea.vmem [#allocation9], %s1202
          %1204 = dma.done %s1200, 2048
        $region76: #{tpu_custom_call.1} parent=71 // pred_fallthru
          _
      $region72: #{tpu_custom_call.1} parent=5 // pred_fallthru
        _
    $region6: #{tpu_custom_call.1} parent=1 // loop_footer
      %s23 = sadd.s32 1, %s19
    $region7: #{tpu_custom_call.1} parent=1 // loop_footer_branch
      %18 = sbr.rel target = $region3
    $region8: #{tpu_custom_call.1} parent=1 // loop_exit
      _
    %1205 = vsyncpa [#allocation4], 1
    %s1206 = scalar_lea.sflag [#allocation4], 1
    %1207 = vsyncpa %s1206, 1
    %1208 = vsyncpa [#allocation7], 1
    %s1209 = scalar_lea.sflag [#allocation7], 1
    %1210 = vsyncpa %s1209, 1
    %1211 = vsyncpa [#allocation5], 1
    %s1212 = scalar_lea.sflag [#allocation5], 1
    %1213 = vsyncpa %s1212, 1

</llo_original>
